<compile_context>
chip_gen: v5e
topology: v5e:2x2
jax: 0.10.0
libtpu: 0.0.40
codegen_flags: <defaults>
</compile_context>

<pallas_src>
import functools

import jax
import jax.numpy as jnp
from jax.experimental import pallas as pl
from jax.experimental.pallas import tpu as pltpu


def _round_up(v, m):
    return ((v + m - 1) // m) * m


def _choose_tiles(m, k, n, itemsize, vmem_budget=40 * 1024 * 1024):
    """Pick (tm, tn): big 8/128-aligned tiles, bounded by a v7x-safe VMEM budget."""
    # M tile: multiple of 8 (sublane); large to amortize ~0.35us/step pipeline overhead.
    tm = 512 if m >= 512 else _round_up(m, 8)
    # N tile: multiple of 128 (lane-dense unmasked stores) when possible, else full N.
    tn = min(n, 512) if n % 128 == 0 else n

    def footprint(tm_, tn_):  # 2x for BlockSpec double-buffering of x, W, out (+bias)
        return 2 * (tm_ * k + k * tn_ + tm_ * tn_ + tn_) * itemsize

    while footprint(tm, tn) > vmem_budget and tn > 128 and tn % 256 == 0:
        tn //= 2
    while footprint(tm, tn) > vmem_budget and tm > 64:
        tm = max(64, _round_up(tm // 2, 8))
    return tm, tn, footprint(tm, tn)


def _linear_kernel(x_ref, w_ref, b_ref, o_ref, *, apply_relu):
    # x:(tm,K)  w:(K,tn)  b:(1,tn)  ->  o:(tm,tn)
    # Keep operands in their native dtype; accumulate in f32 on the MXU.
    y = jnp.dot(x_ref[...], w_ref[...], preferred_element_type=jnp.float32)
    y = y + b_ref[...].astype(jnp.float32)
    if apply_relu:
        y = jnp.maximum(y, 0.0)
    o_ref[...] = y.astype(o_ref.dtype)


def _linear_pallas(x2, w_t, b, *, apply_relu):
    """x2: (m, k); w_t: (k, n) pre-transposed weight; b: (n,)."""
    m, k = x2.shape
    k_w, n = w_t.shape
    assert k_w == k
    itemsize = jnp.dtype(x2.dtype).itemsize
    tm, tn, fp = _choose_tiles(m, k, n, itemsize)

    grid = (pl.cdiv(m, tm), pl.cdiv(n, tn))  # M outer, N inner: x tile fetched once per i
    vmem_limit = int(min(max(fp + (4 << 20), 16 << 20), 64 << 20))

    kernel = functools.partial(_linear_kernel, apply_relu=apply_relu)
    return pl.pallas_call(
        kernel,
        out_shape=jax.ShapeDtypeStruct((m, n), x2.dtype),
        grid_spec=pltpu.PrefetchScalarGridSpec(
            num_scalar_prefetch=0,
            grid=grid,
            in_specs=[
                pl.BlockSpec((tm, k), lambda i, j: (i, 0)),   # activations tile (K untiled)
                pl.BlockSpec((k, tn), lambda i, j: (0, j)),   # weight column tile
                pl.BlockSpec((1, tn), lambda i, j: (0, j)),   # bias tile
            ],
            out_specs=pl.BlockSpec((tm, tn), lambda i, j: (i, j)),
        ),
        compiler_params=pltpu.CompilerParams(
            dimension_semantics=("parallel", "parallel"),
            vmem_limit_bytes=vmem_limit,
        ),
    )(x2, w_t, b.reshape(1, n))


@jax.jit
def mlp_forward(x, weights_t, biases):
    """MLP forward.  weights_t: tuple of (in_i, out_i) pre-transposed weights (done once,
    outside jit, at model-init time); biases: tuple of (out_i,).  ReLU after every layer
    except the last, matching the PyTorch module."""
    num_layers = len(weights_t)
    lead_shape = x.shape[:-1]
    h = x.reshape(-1, x.shape[-1])
    for i, (w_t, b) in enumerate(zip(weights_t, biases)):
        h = _linear_pallas(h, w_t, b, apply_relu=(i < num_layers - 1))
    return h.reshape(*lead_shape, h.shape[-1])


def _reference(x, weights, biases):
    """Pure-JAX reference with PyTorch-layout weights (out, in)."""
    num_layers = len(weights)
    h = x
    for i, (w, b) in enumerate(zip(weights, biases)):
        h = h @ w.T + b
        if i < num_layers - 1:
            h = jnp.maximum(h, 0.0)
    return h


if __name__ == "__main__":
    # MLP(input_dim=32, hidden_dim=64, output_dim=32, num_layers=3) on x of (batch=2, seq=8, 32)
    batch, seq = 2, 8
    input_dim, hidden_dim, output_dim, num_layers = 32, 64, 32, 3
    dims = [input_dim] + [hidden_dim] * (num_layers - 1) + [output_dim]

    key = jax.random.PRNGKey(0)
    kx, key = jax.random.split(key)
    x = jax.random.normal(kx, (batch, seq, input_dim), dtype=jnp.float32)

    # PyTorch-style init: W_i is (out_i, in_i), uniform(+-1/sqrt(in_i)).
    weights, biases = [], []
    for n_in, n_out in zip(dims[:-1], dims[1:]):
        kw, kb, key = jax.random.split(key, 3)
        bound = 1.0 / (n_in ** 0.5)
        weights.append(jax.random.uniform(kw, (n_out, n_in), minval=-bound, maxval=bound,
                                          dtype=jnp.float32))
        biases.append(jax.random.uniform(kb, (n_out,), minval=-bound, maxval=bound,
                                         dtype=jnp.float32))

    # Pre-transpose ONCE (model-init time, outside jit) -> (in, out) layout for the kernel.
    weights_t = tuple(w.T for w in weights)
    biases_t = tuple(biases)

    out = mlp_forward(x, weights_t, biases_t)
    out = jax.block_until_ready(out)

    ref = _reference(x, weights, biases)
    assert out.shape == (batch, seq, output_dim), out.shape
    err = float(jnp.max(jnp.abs(out - ref)))
    assert jnp.allclose(out, ref, atol=1e-4, rtol=1e-4), err

    print("KERNEL_OK")
</pallas_src>

<mosaic_0001>
module attributes {stable_mosaic.version = 11 : i64} {
  func.func @_linear_kernel(%arg0: i32, %arg1: i32, %arg2: memref<16x64xf32, #tpu.memory_space<vmem>>, %arg3: memref<64x32xf32, #tpu.memory_space<vmem>>, %arg4: memref<1x32xf32, #tpu.memory_space<vmem>>, %arg5: memref<16x32xf32, #tpu.memory_space<vmem>>) attributes {dimension_semantics = [#tpu.dimension_semantics<parallel>, #tpu.dimension_semantics<parallel>], iteration_bounds = array<i64: 1, 1>, scalar_prefetch = 0 : i64, scratch_operands = 0 : i64, tpu.core_type = #tpu.core_type<tc>, window_params = [{transform_indices = @transform_0, window_bounds = array<i64: 16, 64>}, {transform_indices = @transform_1, window_bounds = array<i64: 64, 32>}, {transform_indices = @transform_2, window_bounds = array<i64: 1, 32>}, {transform_indices = @transform_3, window_bounds = array<i64: 16, 32>}]} {
    %c0 = arith.constant 0 : index
    %c0_0 = arith.constant 0 : index
    %0 = vector.load %arg2[%c0, %c0_0] : memref<16x64xf32, #tpu.memory_space<vmem>>, vector<16x64xf32>
    %c0_1 = arith.constant 0 : index
    %c0_2 = arith.constant 0 : index
    %1 = vector.load %arg3[%c0_1, %c0_2] : memref<64x32xf32, #tpu.memory_space<vmem>>, vector<64x32xf32>
    %cst = arith.constant dense<0.000000e+00> : vector<16x32xf32>
    %2 = tpu.matmul %0, %1, %cst {dimension_numbers = #tpu.dot_dimension_numbers<[1], [0], [0], [1], [0, 0, 1, 1], [], []>} : vector<16x64xf32>, vector<64x32xf32>, vector<16x32xf32> -> vector<16x32xf32>
    %c0_3 = arith.constant 0 : index
    %c0_4 = arith.constant 0 : index
    %3 = vector.load %arg4[%c0_3, %c0_4] : memref<1x32xf32, #tpu.memory_space<vmem>>, vector<1x32xf32>
    %4 = vector.broadcast %3 : vector<1x32xf32> to vector<16x32xf32>
    %5 = arith.addf %2, %4 : vector<16x32xf32>
    %c0_5 = arith.constant 0 : index
    %c0_6 = arith.constant 0 : index
    %6 = vector.load %arg5[%c0_5, %c0_6] : memref<16x32xf32, #tpu.memory_space<vmem>>, vector<16x32xf32>
    tpu.vector_store %arg5[%c0_5, %c0_6], %5 {strides = array<i32>} : memref<16x32xf32, #tpu.memory_space<vmem>>, vector<16x32xf32>,
    return
  }
  func.func @transform_0(%arg0: i32, %arg1: i32) -> (i32, i32) {
    %c0_i32 = arith.constant 0 : i32
    %c0_i32_0 = arith.constant 0 : i32
    return %arg0, %c0_i32 : i32, i32
  }
  func.func @transform_1(%arg0: i32, %arg1: i32) -> (i32, i32) {
    %c0_i32 = arith.constant 0 : i32
    %c0_i32_0 = arith.constant 0 : i32
    return %c0_i32, %arg1 : i32, i32
  }
  func.func @transform_2(%arg0: i32, %arg1: i32) -> (i32, i32) {
    %c0_i32 = arith.constant 0 : i32
    %c0_i32_0 = arith.constant 0 : i32
    return %c0_i32, %arg1 : i32, i32
  }
  func.func @transform_3(%arg0: i32, %arg1: i32) -> (i32, i32) {
    %c0_i32 = arith.constant 0 : i32
    return %arg0, %arg1 : i32, i32
  }
}

module attributes {stable_mosaic.version = 11 : i64} {
  func.func @_linear_kernel(%arg0: i32, %arg1: i32, %arg2: memref<16x64xf32, #tpu.memory_space<vmem>>, %arg3: memref<64x64xf32, #tpu.memory_space<vmem>>, %arg4: memref<1x64xf32, #tpu.memory_space<vmem>>, %arg5: memref<16x64xf32, #tpu.memory_space<vmem>>) attributes {dimension_semantics = [#tpu.dimension_semantics<parallel>, #tpu.dimension_semantics<parallel>], iteration_bounds = array<i64: 1, 1>, scalar_prefetch = 0 : i64, scratch_operands = 0 : i64, tpu.core_type = #tpu.core_type<tc>, window_params = [{transform_indices = @transform_0, window_bounds = array<i64: 16, 64>}, {transform_indices = @transform_1, window_bounds = array<i64: 64, 64>}, {transform_indices = @transform_2, window_bounds = array<i64: 1, 64>}, {transform_indices = @transform_3, window_bounds = array<i64: 16, 64>}]} {
    %c0 = arith.constant 0 : index
    %c0_0 = arith.constant 0 : index
    %0 = vector.load %arg2[%c0, %c0_0] : memref<16x64xf32, #tpu.memory_space<vmem>>, vector<16x64xf32>
    %c0_1 = arith.constant 0 : index
    %c0_2 = arith.constant 0 : index
    %1 = vector.load %arg3[%c0_1, %c0_2] : memref<64x64xf32, #tpu.memory_space<vmem>>, vector<64x64xf32>
    %cst = arith.constant dense<0.000000e+00> : vector<16x64xf32>
    %2 = tpu.matmul %0, %1, %cst {dimension_numbers = #tpu.dot_dimension_numbers<[1], [0], [0], [1], [0, 0, 1, 1], [], []>} : vector<16x64xf32>, vector<64x64xf32>, vector<16x64xf32> -> vector<16x64xf32>
    %c0_3 = arith.constant 0 : index
    %c0_4 = arith.constant 0 : index
    %3 = vector.load %arg4[%c0_3, %c0_4] : memref<1x64xf32, #tpu.memory_space<vmem>>, vector<1x64xf32>
    %4 = vector.broadcast %3 : vector<1x64xf32> to vector<16x64xf32>
    %5 = arith.addf %2, %4 : vector<16x64xf32>
    %cst_5 = arith.constant 0.000000e+00 : f32
    %6 = vector.broadcast %cst_5 : f32 to vector<16x64xf32>
    %7 = arith.maximumf %5, %6 : vector<16x64xf32>
    %c0_6 = arith.constant 0 : index
    %c0_7 = arith.constant 0 : index
    %8 = vector.load %arg5[%c0_6, %c0_7] : memref<16x64xf32, #tpu.memory_space<vmem>>, vector<16x64xf32>
    tpu.vector_store %arg5[%c0_6, %c0_7], %7 {strides = array<i32>} : memref<16x64xf32, #tpu.memory_space<vmem>>, vector<16x64xf32>,
    return
  }
  func.func @transform_0(%arg0: i32, %arg1: i32) -> (i32, i32) {
    %c0_i32 = arith.constant 0 : i32
    %c0_i32_0 = arith.constant 0 : i32
    return %arg0, %c0_i32 : i32, i32
  }
  func.func @transform_1(%arg0: i32, %arg1: i32) -> (i32, i32) {
    %c0_i32 = arith.constant 0 : i32
    %c0_i32_0 = arith.constant 0 : i32
    return %c0_i32, %arg1 : i32, i32
  }
  func.func @transform_2(%arg0: i32, %arg1: i32) -> (i32, i32) {
    %c0_i32 = arith.constant 0 : i32
    %c0_i32_0 = arith.constant 0 : i32
    return %c0_i32, %arg1 : i32, i32
  }
  func.func @transform_3(%arg0: i32, %arg1: i32) -> (i32, i32) {
    %c0_i32 = arith.constant 0 : i32
    return %arg0, %arg1 : i32, i32
  }
}

module attributes {stable_mosaic.version = 11 : i64} {
  func.func @_linear_kernel(%arg0: i32, %arg1: i32, %arg2: memref<16x32xf32, #tpu.memory_space<vmem>>, %arg3: memref<32x64xf32, #tpu.memory_space<vmem>>, %arg4: memref<1x64xf32, #tpu.memory_space<vmem>>, %arg5: memref<16x64xf32, #tpu.memory_space<vmem>>) attributes {dimension_semantics = [#tpu.dimension_semantics<parallel>, #tpu.dimension_semantics<parallel>], iteration_bounds = array<i64: 1, 1>, scalar_prefetch = 0 : i64, scratch_operands = 0 : i64, tpu.core_type = #tpu.core_type<tc>, window_params = [{transform_indices = @transform_0, window_bounds = array<i64: 16, 32>}, {transform_indices = @transform_1, window_bounds = array<i64: 32, 64>}, {transform_indices = @transform_2, window_bounds = array<i64: 1, 64>}, {transform_indices = @transform_3, window_bounds = array<i64: 16, 64>}]} {
    %c0 = arith.constant 0 : index
    %c0_0 = arith.constant 0 : index
    %0 = vector.load %arg2[%c0, %c0_0] : memref<16x32xf32, #tpu.memory_space<vmem>>, vector<16x32xf32>
    %c0_1 = arith.constant 0 : index
    %c0_2 = arith.constant 0 : index
    %1 = vector.load %arg3[%c0_1, %c0_2] : memref<32x64xf32, #tpu.memory_space<vmem>>, vector<32x64xf32>
    %cst = arith.constant dense<0.000000e+00> : vector<16x64xf32>
    %2 = tpu.matmul %0, %1, %cst {dimension_numbers = #tpu.dot_dimension_numbers<[1], [0], [0], [1], [0, 0, 1, 1], [], []>} : vector<16x32xf32>, vector<32x64xf32>, vector<16x64xf32> -> vector<16x64xf32>
    %c0_3 = arith.constant 0 : index
    %c0_4 = arith.constant 0 : index
    %3 = vector.load %arg4[%c0_3, %c0_4] : memref<1x64xf32, #tpu.memory_space<vmem>>, vector<1x64xf32>
    %4 = vector.broadcast %3 : vector<1x64xf32> to vector<16x64xf32>
    %5 = arith.addf %2, %4 : vector<16x64xf32>
    %cst_5 = arith.constant 0.000000e+00 : f32
    %6 = vector.broadcast %cst_5 : f32 to vector<16x64xf32>
    %7 = arith.maximumf %5, %6 : vector<16x64xf32>
    %c0_6 = arith.constant 0 : index
    %c0_7 = arith.constant 0 : index
    %8 = vector.load %arg5[%c0_6, %c0_7] : memref<16x64xf32, #tpu.memory_space<vmem>>, vector<16x64xf32>
    tpu.vector_store %arg5[%c0_6, %c0_7], %7 {strides = array<i32>} : memref<16x64xf32, #tpu.memory_space<vmem>>, vector<16x64xf32>,
    return
  }
  func.func @transform_0(%arg0: i32, %arg1: i32) -> (i32, i32) {
    %c0_i32 = arith.constant 0 : i32
    %c0_i32_0 = arith.constant 0 : i32
    return %arg0, %c0_i32 : i32, i32
  }
  func.func @transform_1(%arg0: i32, %arg1: i32) -> (i32, i32) {
    %c0_i32 = arith.constant 0 : i32
    %c0_i32_0 = arith.constant 0 : i32
    return %c0_i32, %arg1 : i32, i32
  }
  func.func @transform_2(%arg0: i32, %arg1: i32) -> (i32, i32) {
    %c0_i32 = arith.constant 0 : i32
    %c0_i32_0 = arith.constant 0 : i32
    return %c0_i32, %arg1 : i32, i32
  }
  func.func @transform_3(%arg0: i32, %arg1: i32) -> (i32, i32) {
    %c0_i32 = arith.constant 0 : i32
    return %arg0, %arg1 : i32, i32
  }
}

</mosaic_0001>

<llo_original>
// kernel: mlp_forward.5
$region0: #{mlp_forward.5}
  #allocation0 [shape = 'u32[]', space=smem, size = 0x4, offset = 0x4, fixed_abs, tag = 'smem constant byte address 0x4 - core index']
  #allocation1 [shape = 'u32[72,128]{1,0:T(1,128)}', space=vmem, size = 0x9000, scoped, tag = 'internal scratch']
  %s0 = inlined_call_operand.vmem [shape: f32[16,64], index: 0, kind: input, shape index: {}]
  %s1 = inlined_call_operand.vmem [shape: f32[64,32], index: 1, kind: input, shape index: {}]
  %s2 = inlined_call_operand.vmem [shape: f32[1,32], index: 2, kind: input, shape index: {}]
  %s3 = inlined_call_operand.hbm [shape: f32[16,32], index: 3, kind: output, shape index: {}]
  %s4 = sld [smem:[#allocation0]]
  $region22: #{mlp_forward.5} parent=0
    _
  %s6 = ssub.s32 1, %s4
  %s7 = scalar_select 0, %s6, %s4
  $region1: #{mlp_forward.5} parent=0
    #allocation2 [shape = 'u8[8192]{0}', space=vmem, size = 0x2000, scoped, tag = 'output window, operand 0, single buffered']
    #allocation3 [shape = 's32[1]{0}', space=sflag, size = 0x4, scoped, tag = 'scoped memory for mlp_forward.5']
    %8 = vsyncpa [#allocation3], 0
    // Predicated region
    $region2: #{mlp_forward.5} parent=1 // pred_check
      _
    $region3: #{mlp_forward.5} parent=1 // pred_check_branch
      %10 = sbr.rel (0) target = $region5
    $region4: #{mlp_forward.5} parent=1 // pred_region
      _
    $region5: #{mlp_forward.5} parent=1 // pred_fallthru
      _
    // Predicated region
    $region6: #{mlp_forward.5} parent=1 // pred_check
      _
    $region7: #{mlp_forward.5} parent=1 // pred_check_branch
      %12 = sbr.rel (0) target = $region9
    $region8: #{mlp_forward.5} parent=1 // pred_region
      _
    $region9: #{mlp_forward.5} parent=1 // pred_fallthru
      _
    // Predicated region
    $region10: #{mlp_forward.5} parent=1 // pred_check
      _
    $region11: #{mlp_forward.5} parent=1 // pred_check_branch
      %14 = sbr.rel (0) target = $region13
    $region12: #{mlp_forward.5} parent=1 // pred_region
      _
    $region13: #{mlp_forward.5} parent=1 // pred_fallthru
      _
    %v15 = vld [vmem:[%s0] sm:$0xff]
    %v16 = vld [vmem:[%s0 + $0x8] sm:$0xff]
    %v17 = vld [vmem:[%s1] sm:$0xff]
    %v18 = vld [vmem:[%s1 + $0x8] sm:$0xff]
    %v19 = vld [vmem:[%s1 + $0x10] sm:$0xff]
    %v20 = vld [vmem:[%s1 + $0x18] sm:$0xff]
    %v21 = vld [vmem:[%s1 + $0x20] sm:$0xff]
    %v22 = vld [vmem:[%s1 + $0x28] sm:$0xff]
    %v23 = vld [vmem:[%s1 + $0x30] sm:$0xff]
    %v24 = vld [vmem:[%s1 + $0x38] sm:$0xff]
    %v25 = vld [vmem:[%s2] sm:$0x1]
    %v27 = vperm.slane %v25, 0
    %vm29 = vcmask 523264
    %v31 = vsel %vm29, %v15, 0
    %v34 = vsel %vm29, %v16, 0
    %36 = vmatpush.msra.mxu0 0.0
    %37 = vmatpush.msra.mxu0 0.0
    %38 = vmatpush.msra.mxu0 0.0
    %39 = vmatpush.msra.mxu0 0.0
    %40 = vmatpush.msra.mxu0 0.0
    %41 = vmatpush.msra.mxu0 0.0
    %42 = vmatpush.msra.mxu0 0.0
    %43 = vmatpush.msra.mxu0 0.0
    %44 = vmatpush.msra.mxu0 %v24
    %45 = vmatpush.msra.mxu0 %v23
    %46 = vmatpush.msra.mxu0 %v22
    %47 = vmatpush.msra.mxu0 %v21
    %48 = vmatpush.msra.mxu0 %v20
    %49 = vmatpush.msra.mxu0 %v19
    %50 = vmatpush.msra.mxu0 %v18
    %51 = vmatpush.msra.mxu0 %v17
    %52 = vmatmul.f32.gmra.mxu0 %v31
    %v53 = vpop.f32.mrf.mxu0
    %v54 = vadd.f32 %v27, %v53
    %55 = vmatmul.f32.gmra.mxu0 %v34
    %v56 = vpop.f32.mrf.mxu0
    %v57 = vadd.f32 %v27, %v56
    %58 = vdwg.mxu0
    %vm59 = vcmask 261120
    %60 = vst.msk [vmem:[#allocation2] sm:$0xff] %vm59, %v54
    %61 = vst.msk [vmem:[#allocation2 + $0x8] sm:$0xff] %vm59, %v57
    // Predicated region
    $region14: #{mlp_forward.5} parent=1 // pred_check
      _
    $region15: #{mlp_forward.5} parent=1 // pred_check_branch
      %63 = sbr.rel (0) target = $region17
    $region16: #{mlp_forward.5} parent=1 // pred_region
      %65 = vsyncadd [#allocation3], 0
      %s66 = sshll.u32 [#allocation2], 4
      %s67 = int_to_ptr.vmem [resolvable:$true] %s66
      %s68 = sshll.u32 %s3, 4
      %s69 = int_to_ptr.hbm [resolvable:$true] %s68
      %74 = dma.vmem_to_hbm [thread:$0]  %s67, 256, %s69, [#allocation3], 128, 128, 8
    $region17: #{mlp_forward.5} parent=1 // pred_fallthru
      _
    // Predicated region
    $region18: #{mlp_forward.5} parent=1 // pred_check
      _
    $region19: #{mlp_forward.5} parent=1 // pred_check_branch
      %76 = sbr.rel (0) target = $region21
    $region20: #{mlp_forward.5} parent=1 // pred_region
      %78 = dma.done [#allocation3], 256
    $region21: #{mlp_forward.5} parent=1 // pred_fallthru
      _
    %79 = vsyncpa [#allocation3], 1

// kernel: mlp_forward.4
$region0: #{mlp_forward.4}
  #allocation0 [shape = 'u32[]', space=smem, size = 0x4, offset = 0x4, fixed_abs, tag = 'smem constant byte address 0x4 - core index']
  #allocation1 [shape = 'u32[72,128]{1,0:T(1,128)}', space=vmem, size = 0x9000, scoped, tag = 'internal scratch']
  %s0 = inlined_call_operand.vmem [shape: f32[16,64], index: 0, kind: input, shape index: {}]
  %s1 = inlined_call_operand.hbm [shape: f32[64,64], index: 1, kind: input, shape index: {}]
  %s2 = inlined_call_operand.vmem [shape: f32[1,64], index: 2, kind: input, shape index: {}]
  %s3 = inlined_call_operand.vmem [shape: f32[16,64], index: 3, kind: output, shape index: {}]
  %s4 = sld [smem:[#allocation0]]
  $region26: #{mlp_forward.4} parent=0
    _
  %s6 = ssub.s32 1, %s4
  %s7 = scalar_select 0, %s6, %s4
  $region1: #{mlp_forward.4} parent=0
    #allocation2 [shape = 'u8[32768]{0}', space=vmem, size = 0x8000, scoped, tag = 'input window, operand 1, single buffered']
    #allocation3 [shape = 's32[1]{0}', space=sflag, size = 0x4, scoped, tag = 'scoped memory for mlp_forward.4']
    %8 = vsyncpa [#allocation3], 0
    // Predicated region
    $region2: #{mlp_forward.4} parent=1 // pred_check
      _
    $region3: #{mlp_forward.4} parent=1 // pred_check_branch
      %10 = sbr.rel (0) target = $region5
    $region4: #{mlp_forward.4} parent=1 // pred_region
      _
    $region5: #{mlp_forward.4} parent=1 // pred_fallthru
      _
    // Predicated region
    $region6: #{mlp_forward.4} parent=1 // pred_check
      _
    $region7: #{mlp_forward.4} parent=1 // pred_check_branch
      %12 = sbr.rel (0) target = $region9
    $region8: #{mlp_forward.4} parent=1 // pred_region
      %14 = vsyncadd [#allocation3], 0
      %s15 = sshll.u32 %s1, 4
      %s16 = int_to_ptr.hbm [resolvable:$true] %s15
      %s17 = sshll.u32 [#allocation2], 4
      %s18 = int_to_ptr.vmem [resolvable:$true] %s17
      %23 = dma.hbm_to_vmem [thread:$0]  %s16, 1024, %s18, [#allocation3], 128, 128, 8
    $region9: #{mlp_forward.4} parent=1 // pred_fallthru
      _
    // Predicated region
    $region10: #{mlp_forward.4} parent=1 // pred_check
      _
    $region11: #{mlp_forward.4} parent=1 // pred_check_branch
      %25 = sbr.rel (0) target = $region13
    $region12: #{mlp_forward.4} parent=1 // pred_region
      _
    $region13: #{mlp_forward.4} parent=1 // pred_fallthru
      _
    // Predicated region
    $region14: #{mlp_forward.4} parent=1 // pred_check
      _
    $region15: #{mlp_forward.4} parent=1 // pred_check_branch
      %27 = sbr.rel (0) target = $region17
    $region16: #{mlp_forward.4} parent=1 // pred_region
      %29 = dma.done [#allocation3], 1024
    $region17: #{mlp_forward.4} parent=1 // pred_fallthru
      _
    %v30 = vld [vmem:[%s0] sm:$0xff]
    %v31 = vld [vmem:[%s0 + $0x8] sm:$0xff]
    %v32 = vld [vmem:[#allocation2] sm:$0xff]
    %v33 = vld [vmem:[#allocation2 + $0x8] sm:$0xff]
    %v34 = vld [vmem:[#allocation2 + $0x10] sm:$0xff]
    %v35 = vld [vmem:[#allocation2 + $0x18] sm:$0xff]
    %v36 = vld [vmem:[#allocation2 + $0x20] sm:$0xff]
    %v37 = vld [vmem:[#allocation2 + $0x28] sm:$0xff]
    %v38 = vld [vmem:[#allocation2 + $0x30] sm:$0xff]
    %v39 = vld [vmem:[#allocation2 + $0x38] sm:$0xff]
    %v40 = vld [vmem:[%s2] sm:$0x1]
    %v42 = vperm.slane %v40, 0
    %vm44 = vcmask 523264
    %v46 = vsel %vm44, %v30, 0
    %v49 = vsel %vm44, %v31, 0
    %51 = vmatpush.msra.mxu0 0.0
    %52 = vmatpush.msra.mxu0 0.0
    %53 = vmatpush.msra.mxu0 0.0
    %54 = vmatpush.msra.mxu0 0.0
    %55 = vmatpush.msra.mxu0 0.0
    %56 = vmatpush.msra.mxu0 0.0
    %57 = vmatpush.msra.mxu0 0.0
    %58 = vmatpush.msra.mxu0 0.0
    %59 = vmatpush.msra.mxu0 %v39
    %60 = vmatpush.msra.mxu0 %v38
    %61 = vmatpush.msra.mxu0 %v37
    %62 = vmatpush.msra.mxu0 %v36
    %63 = vmatpush.msra.mxu0 %v35
    %64 = vmatpush.msra.mxu0 %v34
    %65 = vmatpush.msra.mxu0 %v33
    %66 = vmatpush.msra.mxu0 %v32
    %67 = vmatmul.f32.gmra.mxu0 %v46
    %v68 = vpop.f32.mrf.mxu0
    %v69 = vadd.f32 %v42, %v68
    %70 = vmatmul.f32.gmra.mxu0 %v49
    %v71 = vpop.f32.mrf.mxu0
    %v72 = vadd.f32 %v42, %v71
    %73 = vdwg.mxu0
    %v74 = vmax.f32 %v69, 0.0
    %v75 = vmax.f32 %v72, 0.0
    %76 = vst.msk [vmem:[%s3] sm:$0xff] %vm44, %v74
    %77 = vst.msk [vmem:[%s3 + $0x8] sm:$0xff] %vm44, %v75
    // Predicated region
    $region18: #{mlp_forward.4} parent=1 // pred_check
      _
    $region19: #{mlp_forward.4} parent=1 // pred_check_branch
      %79 = sbr.rel (0) target = $region21
    $region20: #{mlp_forward.4} parent=1 // pred_region
      _
    $region21: #{mlp_forward.4} parent=1 // pred_fallthru
      _
    // Predicated region
    $region22: #{mlp_forward.4} parent=1 // pred_check
      _
    $region23: #{mlp_forward.4} parent=1 // pred_check_branch
      %81 = sbr.rel (0) target = $region25
    $region24: #{mlp_forward.4} parent=1 // pred_region
      _
    $region25: #{mlp_forward.4} parent=1 // pred_fallthru
      _
    %82 = vsyncpa [#allocation3], 1

// kernel: mlp_forward.3
$region0: #{mlp_forward.3}
  #allocation0 [shape = 'u32[]', space=smem, size = 0x4, offset = 0x4, fixed_abs, tag = 'smem constant byte address 0x4 - core index']
  #allocation1 [shape = 'u32[72,128]{1,0:T(1,128)}', space=vmem, size = 0x9000, scoped, tag = 'internal scratch']
  %s0 = inlined_call_operand.hbm [shape: f32[16,32], index: 0, kind: input, shape index: {}]
  %s1 = inlined_call_operand.hbm [shape: f32[32,64], index: 1, kind: input, shape index: {}]
  %s2 = inlined_call_operand.vmem [shape: f32[1,64], index: 2, kind: input, shape index: {}]
  %s3 = inlined_call_operand.vmem [shape: f32[16,64], index: 3, kind: output, shape index: {}]
  %s4 = sld [smem:[#allocation0]]
  $region30: #{mlp_forward.3} parent=0
    _
  %s6 = ssub.s32 1, %s4
  %s7 = scalar_select 0, %s6, %s4
  $region1: #{mlp_forward.3} parent=0
    #allocation2 [shape = 'u8[8192]{0}', space=vmem, size = 0x2000, scoped, tag = 'input window, operand 0, single buffered']
    #allocation3 [shape = 's32[1]{0}', space=sflag, size = 0x4, scoped, tag = 'scoped memory for mlp_forward.3']
    #allocation4 [shape = 'u8[16384]{0}', space=vmem, size = 0x4000, scoped, tag = 'input window, operand 1, single buffered']
    #allocation5 [shape = 's32[1]{0}', space=sflag, size = 0x4, scoped, tag = 'scoped memory for mlp_forward.3']
    %8 = vsyncpa [#allocation3], 0
    %9 = vsyncpa [#allocation5], 0
    // Predicated region
    $region2: #{mlp_forward.3} parent=1 // pred_check
      _
    $region3: #{mlp_forward.3} parent=1 // pred_check_branch
      %11 = sbr.rel (0) target = $region5
    $region4: #{mlp_forward.3} parent=1 // pred_region
      %13 = vsyncadd [#allocation3], 0
      %s14 = sshll.u32 %s0, 4
      %s15 = int_to_ptr.hbm [resolvable:$true] %s14
      %s16 = sshll.u32 [#allocation2], 4
      %s17 = int_to_ptr.vmem [resolvable:$true] %s16
      %22 = dma.hbm_to_vmem [thread:$0]  %s15, 256, %s17, [#allocation3], 128, 128, 8
    $region5: #{mlp_forward.3} parent=1 // pred_fallthru
      _
    // Predicated region
    $region6: #{mlp_forward.3} parent=1 // pred_check
      _
    $region7: #{mlp_forward.3} parent=1 // pred_check_branch
      %24 = sbr.rel (0) target = $region9
    $region8: #{mlp_forward.3} parent=1 // pred_region
      %26 = vsyncadd [#allocation5], 0
      %s27 = sshll.u32 %s1, 4
      %s28 = int_to_ptr.hbm [resolvable:$true] %s27
      %s29 = sshll.u32 [#allocation4], 4
      %s30 = int_to_ptr.vmem [resolvable:$true] %s29
      %35 = dma.hbm_to_vmem [thread:$0]  %s28, 512, %s30, [#allocation5], 128, 128, 8
    $region9: #{mlp_forward.3} parent=1 // pred_fallthru
      _
    // Predicated region
    $region10: #{mlp_forward.3} parent=1 // pred_check
      _
    $region11: #{mlp_forward.3} parent=1 // pred_check_branch
      %37 = sbr.rel (0) target = $region13
    $region12: #{mlp_forward.3} parent=1 // pred_region
      _
    $region13: #{mlp_forward.3} parent=1 // pred_fallthru
      _
    // Predicated region
    $region14: #{mlp_forward.3} parent=1 // pred_check
      _
    $region15: #{mlp_forward.3} parent=1 // pred_check_branch
      %39 = sbr.rel (0) target = $region17
    $region16: #{mlp_forward.3} parent=1 // pred_region
      %41 = dma.done [#allocation3], 256
    $region17: #{mlp_forward.3} parent=1 // pred_fallthru
      _
    // Predicated region
    $region18: #{mlp_forward.3} parent=1 // pred_check
      _
    $region19: #{mlp_forward.3} parent=1 // pred_check_branch
      %43 = sbr.rel (0) target = $region21
    $region20: #{mlp_forward.3} parent=1 // pred_region
      %45 = dma.done [#allocation5], 512
    $region21: #{mlp_forward.3} parent=1 // pred_fallthru
      _
    %v46 = vld [vmem:[#allocation2] sm:$0xff]
    %v47 = vld [vmem:[#allocation2 + $0x8] sm:$0xff]
    %v48 = vld [vmem:[#allocation4] sm:$0xff]
    %v49 = vld [vmem:[#allocation4 + $0x8] sm:$0xff]
    %v50 = vld [vmem:[#allocation4 + $0x10] sm:$0xff]
    %v51 = vld [vmem:[#allocation4 + $0x18] sm:$0xff]
    %v52 = vld [vmem:[%s2] sm:$0x1]
    %v54 = vperm.slane %v52, 0
    %vm56 = vcmask 261120
    %v58 = vsel %vm56, %v46, 0
    %v61 = vsel %vm56, %v47, 0
    %63 = vmatpush.msra.mxu0 0.0
    %64 = vmatpush.msra.mxu0 0.0
    %65 = vmatpush.msra.mxu0 0.0
    %66 = vmatpush.msra.mxu0 0.0
    %67 = vmatpush.msra.mxu0 0.0
    %68 = vmatpush.msra.mxu0 0.0
    %69 = vmatpush.msra.mxu0 0.0
    %70 = vmatpush.msra.mxu0 0.0
    %71 = vmatpush.msra.mxu0 0.0
    %72 = vmatpush.msra.mxu0 0.0
    %73 = vmatpush.msra.mxu0 0.0
    %74 = vmatpush.msra.mxu0 0.0
    %75 = vmatpush.msra.mxu0 %v51
    %76 = vmatpush.msra.mxu0 %v50
    %77 = vmatpush.msra.mxu0 %v49
    %78 = vmatpush.msra.mxu0 %v48
    %79 = vmatmul.f32.gmra.mxu0 %v58
    %v80 = vpop.f32.mrf.mxu0
    %v81 = vadd.f32 %v54, %v80
    %82 = vmatmul.f32.gmra.mxu0 %v61
    %v83 = vpop.f32.mrf.mxu0
    %v84 = vadd.f32 %v54, %v83
    %85 = vdwg.mxu0
    %v86 = vmax.f32 %v81, 0.0
    %v87 = vmax.f32 %v84, 0.0
    %vm88 = vcmask 523264
    %89 = vst.msk [vmem:[%s3] sm:$0xff] %vm88, %v86
    %90 = vst.msk [vmem:[%s3 + $0x8] sm:$0xff] %vm88, %v87
    // Predicated region
    $region22: #{mlp_forward.3} parent=1 // pred_check
      _
    $region23: #{mlp_forward.3} parent=1 // pred_check_branch
      %92 = sbr.rel (0) target = $region25
    $region24: #{mlp_forward.3} parent=1 // pred_region
      _
    $region25: #{mlp_forward.3} parent=1 // pred_fallthru
      _
    // Predicated region
    $region26: #{mlp_forward.3} parent=1 // pred_check
      _
    $region27: #{mlp_forward.3} parent=1 // pred_check_branch
      %94 = sbr.rel (0) target = $region29
    $region28: #{mlp_forward.3} parent=1 // pred_region
      _
    $region29: #{mlp_forward.3} parent=1 // pred_fallthru
      _
    %95 = vsyncpa [#allocation3], 1
    %96 = vsyncpa [#allocation5], 1

</llo_original>
